<compile_context>
chip_gen: v5e
topology: v5e:2x2
jax: 0.10.0
libtpu: 0.0.40
codegen_flags: <defaults>
</compile_context>

<pallas_src>
import functools

import jax
import jax.numpy as jnp
from jax.experimental import pallas as pl
from jax.experimental.pallas import tpu as pltpu


def _contrastive_kernel(a_ref, p_ref, n_ref, o_ref, acc_ref, *, margin, eps,
                        batch):
    i = pl.program_id(0)

    @pl.when(i == 0)
    def _():
        acc_ref[...] = jnp.zeros_like(acc_ref)

    # Interleave product/reduce pairs so only one (TB, D) product tensor is
    # live at a time (low vreg pressure at large tiles); 'a' stays resident.
    a = a_ref[...].astype(jnp.float32)
    sa = jnp.sum(a * a, axis=-1, keepdims=True)               # (TB, 1)

    p = p_ref[...].astype(jnp.float32)
    dot_ap = jnp.sum(a * p, axis=-1, keepdims=True)           # (TB, 1)
    sp = jnp.sum(p * p, axis=-1, keepdims=True)               # (TB, 1)

    n = n_ref[...].astype(jnp.float32)
    dot_an = jnp.sum(a * n, axis=-1, keepdims=True)           # (TB, 1)
    sn = jnp.sum(n * n, axis=-1, keepdims=True)               # (TB, 1)

    # cos = dot / sqrt(max(|x1|^2 * |x2|^2, eps^2))  (fused rsqrt, one EUP op)
    eps2 = jnp.float32(eps * eps)
    cos_pos = dot_ap * jax.lax.rsqrt(jnp.maximum(sa * sp, eps2))
    cos_neg = dot_an * jax.lax.rsqrt(jnp.maximum(sa * sn, eps2))

    hinge = jnp.maximum(jnp.float32(margin) - cos_pos, 0.0)
    contrib = cos_neg * cos_neg + hinge * hinge               # (TB, 1)

    # Mask rows past the true batch size (ragged / padded last tile).
    tb = contrib.shape[0]
    row = i * tb + jax.lax.broadcasted_iota(jnp.int32, (tb, 1), 0)
    contrib = jnp.where(row < batch, contrib, 0.0)

    # Accumulate raw sums; divide by B exactly once at the end.
    acc_ref[...] += jnp.sum(contrib, keepdims=True)           # (1, 1)

    @pl.when(i == pl.num_programs(0) - 1)
    def _():
        o_ref[...] = (acc_ref[...] * jnp.float32(1.0 / batch)).astype(
            o_ref.dtype)


def _pick_block_rows(B, D, itemsize):
    """Largest batch tile whose 3 double-buffered input streams fit ~24 MiB."""
    budget = 24 << 20
    bytes_per_row = 3 * 2 * D * max(int(itemsize), 4)   # 3 streams, 2-deep, f32
    tb = budget // bytes_per_row
    tb = max(8, min(512, (tb // 8) * 8))
    if tb >= B:
        return B       # single tile; a full-extent block dim is always legal
    return tb


def contrastive_loss(anchor, positive, negative, *, margin=1.0, eps=1e-6,
                     block_rows=None):
    """anchor/positive/negative: (B, D) arrays. Returns a scalar f32 loss."""
    B, D = anchor.shape
    assert positive.shape == (B, D) and negative.shape == (B, D)

    itemsize = jnp.dtype(anchor.dtype).itemsize
    tb = block_rows if block_rows is not None else _pick_block_rows(B, D,
                                                                    itemsize)
    grid = (pl.cdiv(B, tb),)

    kernel = functools.partial(_contrastive_kernel, margin=float(margin),
                               eps=float(eps), batch=B)

    in_spec = pl.BlockSpec((tb, D), lambda i: (i, 0))
    cost = pl.CostEstimate(
        flops=8 * B * D,                       # 5 mul+add reduction streams-ish
        transcendentals=2 * B,                 # two rsqrt per row
        bytes_accessed=3 * B * D * itemsize + 4,
    )

    out = pl.pallas_call(
        kernel,
        out_shape=jax.ShapeDtypeStruct((1, 1), jnp.float32),
        grid_spec=pltpu.PrefetchScalarGridSpec(
            num_scalar_prefetch=0,
            grid=grid,
            in_specs=[in_spec, in_spec, in_spec],
            out_specs=pl.BlockSpec((1, 1), lambda i: (0, 0)),
            scratch_shapes=[pltpu.VMEM((1, 1), jnp.float32)],
        ),
        compiler_params=pltpu.CompilerParams(
            dimension_semantics=("arbitrary",),   # running reduction over B
            vmem_limit_bytes=48 << 20,            # headroom; < v7x 64 MiB phys
        ),
        cost_estimate=cost,
    )(anchor, positive, negative)
    return out[0, 0]


def _reference(anchor, positive, negative, margin=1.0, eps=1e-6):
    def cos(x1, x2):
        dot = jnp.sum(x1 * x2, axis=-1)
        sq = jnp.sum(x1 * x1, axis=-1) * jnp.sum(x2 * x2, axis=-1)
        return dot / jnp.sqrt(jnp.maximum(sq, eps * eps))

    dpos = cos(anchor, positive)
    dneg = cos(anchor, negative)
    return jnp.mean(dneg ** 2) + jnp.mean(jnp.maximum(margin - dpos, 0.0) ** 2)


if __name__ == "__main__":
    key = jax.random.PRNGKey(0)
    k1, k2, k3 = jax.random.split(key, 3)

    # Case 1: small, tile-aligned shapes -> single grid step.
    B, D = 8, 128
    a = jax.random.normal(k1, (B, D), dtype=jnp.float32)
    p = jax.random.normal(k2, (B, D), dtype=jnp.float32)
    n = jax.random.normal(k3, (B, D), dtype=jnp.float32)
    loss = contrastive_loss(a, p, n, margin=1.0)
    jax.block_until_ready(loss)
    ref = _reference(a, p, n, margin=1.0)
    assert jnp.allclose(loss, ref, atol=1e-5, rtol=1e-5), (loss, ref)

    # Case 2: multi-step streamed grid with a ragged last tile (masking path).
    B2, D2 = 20, 256
    a2 = jax.random.normal(k1, (B2, D2), dtype=jnp.float32)
    p2 = jax.random.normal(k2, (B2, D2), dtype=jnp.float32)
    n2 = jax.random.normal(k3, (B2, D2), dtype=jnp.float32)
    loss2 = contrastive_loss(a2, p2, n2, margin=1.0, block_rows=8)
    jax.block_until_ready(loss2)
    ref2 = _reference(a2, p2, n2, margin=1.0)
    assert jnp.allclose(loss2, ref2, atol=1e-5, rtol=1e-5), (loss2, ref2)

    print("KERNEL_OK")
</pallas_src>

<mosaic_0001>
module attributes {stable_mosaic.version = 11 : i64} {
  func.func @_contrastive_kernel(%arg0: i32, %arg1: memref<8x128xf32, #tpu.memory_space<vmem>>, %arg2: memref<8x128xf32, #tpu.memory_space<vmem>>, %arg3: memref<8x128xf32, #tpu.memory_space<vmem>>, %arg4: memref<1x1xf32, #tpu.memory_space<vmem>>, %arg5: memref<1x1xf32, #tpu.memory_space<vmem>>) attributes {dimension_semantics = [#tpu.dimension_semantics<arbitrary>], iteration_bounds = array<i64: 1>, scalar_prefetch = 0 : i64, scratch_operands = 1 : i64, tpu.core_type = #tpu.core_type<tc>, window_params = [{transform_indices = @transform_0, window_bounds = array<i64: 8, 128>}, {transform_indices = @transform_1, window_bounds = array<i64: 8, 128>}, {transform_indices = @transform_2, window_bounds = array<i64: 8, 128>}, {pipeline_mode = #tpu.pipeline_mode<synchronous>, transform_indices = @transform_3, window_bounds = array<i64: 1, 1>}]} {
    %c0_i32 = arith.constant 0 : i32
    %0 = arith.cmpi eq, %arg0, %c0_i32 : i32
    %1 = arith.extui %0 : i1 to i32
    %c0_i32_0 = arith.constant 0 : i32
    %2 = arith.cmpi ne, %1, %c0_i32_0 : i32
    scf.if %2 {
      %cst_23 = arith.constant 0.000000e+00 : f32
      %57 = vector.broadcast %cst_23 : f32 to vector<1x1xf32>
      %c0_24 = arith.constant 0 : index
      %c0_25 = arith.constant 0 : index
      %58 = vector.load %arg5[%c0_24, %c0_25] : memref<1x1xf32, #tpu.memory_space<vmem>>, vector<1x1xf32>
      tpu.vector_store %arg5[%c0_24, %c0_25], %57 {strides = array<i32>} : memref<1x1xf32, #tpu.memory_space<vmem>>, vector<1x1xf32>,
    } else {
    }
    %c0 = arith.constant 0 : index
    %c0_1 = arith.constant 0 : index
    %3 = vector.load %arg1[%c0, %c0_1] : memref<8x128xf32, #tpu.memory_space<vmem>>, vector<8x128xf32>
    %4 = arith.mulf %3, %3 : vector<8x128xf32>
    %cst = arith.constant dense<0.000000e+00> : vector<8xf32>
    %5 = vector.multi_reduction <add>, %4, %cst [1] : vector<8x128xf32> to vector<8xf32>
    %6 = vector.shape_cast %5 : vector<8xf32> to vector<8x1xf32>
    %c0_2 = arith.constant 0 : index
    %c0_3 = arith.constant 0 : index
    %7 = vector.load %arg2[%c0_2, %c0_3] : memref<8x128xf32, #tpu.memory_space<vmem>>, vector<8x128xf32>
    %8 = arith.mulf %3, %7 : vector<8x128xf32>
    %cst_4 = arith.constant dense<0.000000e+00> : vector<8xf32>
    %9 = vector.multi_reduction <add>, %8, %cst_4 [1] : vector<8x128xf32> to vector<8xf32>
    %10 = vector.shape_cast %9 : vector<8xf32> to vector<8x1xf32>
    %11 = arith.mulf %7, %7 : vector<8x128xf32>
    %cst_5 = arith.constant dense<0.000000e+00> : vector<8xf32>
    %12 = vector.multi_reduction <add>, %11, %cst_5 [1] : vector<8x128xf32> to vector<8xf32>
    %13 = vector.shape_cast %12 : vector<8xf32> to vector<8x1xf32>
    %c0_6 = arith.constant 0 : index
    %c0_7 = arith.constant 0 : index
    %14 = vector.load %arg3[%c0_6, %c0_7] : memref<8x128xf32, #tpu.memory_space<vmem>>, vector<8x128xf32>
    %15 = arith.mulf %3, %14 : vector<8x128xf32>
    %cst_8 = arith.constant dense<0.000000e+00> : vector<8xf32>
    %16 = vector.multi_reduction <add>, %15, %cst_8 [1] : vector<8x128xf32> to vector<8xf32>
    %17 = vector.shape_cast %16 : vector<8xf32> to vector<8x1xf32>
    %18 = arith.mulf %14, %14 : vector<8x128xf32>
    %cst_9 = arith.constant dense<0.000000e+00> : vector<8xf32>
    %19 = vector.multi_reduction <add>, %18, %cst_9 [1] : vector<8x128xf32> to vector<8xf32>
    %20 = vector.shape_cast %19 : vector<8xf32> to vector<8x1xf32>
    %21 = arith.mulf %6, %13 : vector<8x1xf32>
    %cst_10 = arith.constant 9.99999996E-13 : f32
    %22 = vector.broadcast %cst_10 : f32 to vector<8x1xf32>
    %23 = arith.maximumf %21, %22 : vector<8x1xf32>
    %24 = math.rsqrt %23 : vector<8x1xf32>
    %25 = arith.mulf %10, %24 : vector<8x1xf32>
    %26 = arith.mulf %6, %20 : vector<8x1xf32>
    %cst_11 = arith.constant 9.99999996E-13 : f32
    %27 = vector.broadcast %cst_11 : f32 to vector<8x1xf32>
    %28 = arith.maximumf %26, %27 : vector<8x1xf32>
    %29 = math.rsqrt %28 : vector<8x1xf32>
    %30 = arith.mulf %17, %29 : vector<8x1xf32>
    %cst_12 = arith.constant 1.000000e+00 : f32
    %31 = vector.broadcast %cst_12 : f32 to vector<8x1xf32>
    %32 = arith.subf %31, %25 : vector<8x1xf32>
    %cst_13 = arith.constant 0.000000e+00 : f32
    %33 = vector.broadcast %cst_13 : f32 to vector<8x1xf32>
    %34 = arith.maximumf %32, %33 : vector<8x1xf32>
    %35 = arith.mulf %30, %30 : vector<8x1xf32>
    %36 = arith.mulf %34, %34 : vector<8x1xf32>
    %37 = arith.addf %35, %36 : vector<8x1xf32>
    %c8_i32 = arith.constant 8 : i32
    %38 = arith.muli %arg0, %c8_i32 : i32
    %39 = tpu.iota {dimensions = array<i32: 0>} : vector<8x1xi32>
    %40 = vector.broadcast %38 : i32 to vector<8x1xi32>
    %41 = arith.addi %40, %39 : vector<8x1xi32>
    %c8_i32_14 = arith.constant 8 : i32
    %42 = vector.broadcast %c8_i32_14 : i32 to vector<8x1xi32>
    %43 = arith.cmpi slt, %41, %42 : vector<8x1xi32>
    %cst_15 = arith.constant 0.000000e+00 : f32
    %44 = vector.broadcast %cst_15 : f32 to vector<8x1xf32>
    %45 = arith.select %43, %37, %44 : vector<8x1xi1>, vector<8x1xf32>
    %c0_16 = arith.constant 0 : index
    %c0_17 = arith.constant 0 : index
    %46 = vector.load %arg5[%c0_16, %c0_17] : memref<1x1xf32, #tpu.memory_space<vmem>>, vector<1x1xf32>
    %47 = vector.shape_cast %45 : vector<8x1xf32> to vector<1x8x1xf32>
    %cst_18 = arith.constant dense<0.000000e+00> : vector<1xf32>
    %48 = vector.multi_reduction <add>, %47, %cst_18 [1, 2] : vector<1x8x1xf32> to vector<1xf32>
    %49 = vector.shape_cast %48 : vector<1xf32> to vector<1x1x1xf32>
    %50 = vector.extract %49[0, 0, 0] : f32 from vector<1x1x1xf32>
    %51 = vector.broadcast %50 : f32 to vector<1x1xf32>
    %52 = arith.addf %46, %51 : vector<1x1xf32>
    %c0_19 = arith.constant 0 : index
    %c0_20 = arith.constant 0 : index
    %53 = vector.load %arg5[%c0_19, %c0_20] : memref<1x1xf32, #tpu.memory_space<vmem>>, vector<1x1xf32>
    tpu.vector_store %arg5[%c0_19, %c0_20], %52 {strides = array<i32>} : memref<1x1xf32, #tpu.memory_space<vmem>>, vector<1x1xf32>,
    %c0_i32_21 = arith.constant 0 : i32
    %54 = arith.cmpi eq, %arg0, %c0_i32_21 : i32
    %55 = arith.extui %54 : i1 to i32
    %c0_i32_22 = arith.constant 0 : i32
    %56 = arith.cmpi ne, %55, %c0_i32_22 : i32
    scf.if %56 {
      %c0_23 = arith.constant 0 : index
      %c0_24 = arith.constant 0 : index
      %57 = vector.load %arg5[%c0_23, %c0_24] : memref<1x1xf32, #tpu.memory_space<vmem>>, vector<1x1xf32>
      %cst_25 = arith.constant 1.250000e-01 : f32
      %58 = vector.broadcast %cst_25 : f32 to vector<1x1xf32>
      %59 = arith.mulf %57, %58 : vector<1x1xf32>
      %c0_26 = arith.constant 0 : index
      %c0_27 = arith.constant 0 : index
      %60 = vector.load %arg4[%c0_26, %c0_27] : memref<1x1xf32, #tpu.memory_space<vmem>>, vector<1x1xf32>
      tpu.vector_store %arg4[%c0_26, %c0_27], %59 {strides = array<i32>} : memref<1x1xf32, #tpu.memory_space<vmem>>, vector<1x1xf32>,
    } else {
    }
    return
  }
  func.func @transform_0(%arg0: i32) -> (i32, i32) {
    %c0_i32 = arith.constant 0 : i32
    %c0_i32_0 = arith.constant 0 : i32
    return %arg0, %c0_i32 : i32, i32
  }
  func.func @transform_1(%arg0: i32) -> (i32, i32) {
    %c0_i32 = arith.constant 0 : i32
    %c0_i32_0 = arith.constant 0 : i32
    return %arg0, %c0_i32 : i32, i32
  }
  func.func @transform_2(%arg0: i32) -> (i32, i32) {
    %c0_i32 = arith.constant 0 : i32
    %c0_i32_0 = arith.constant 0 : i32
    return %arg0, %c0_i32 : i32, i32
  }
  func.func @transform_3(%arg0: i32) -> (i32, i32) {
    %c0_i32 = arith.constant 0 : i32
    %c0_i32_0 = arith.constant 0 : i32
    %c0_i32_1 = arith.constant 0 : i32
    return %c0_i32, %c0_i32_0 : i32, i32
  }
}

</mosaic_0001>

<llo_original>
// kernel: tpu_custom_call.1
$region0: #{tpu_custom_call.1}
  #allocation0 [shape = 'u32[]', space=smem, size = 0x4, offset = 0x4, fixed_abs, tag = 'smem constant byte address 0x4 - core index']
  #allocation1 [shape = 'u32[72,128]{1,0:T(1,128)}', space=vmem, size = 0x9000, scoped, tag = 'internal scratch']
  #allocation2 [shape = 'f32[1,1]{1,0:T(1,128)}', space=vmem, size = 0x200, scoped, tag = 'scratch operand']
  %s0 = inlined_call_operand.hbm [shape: f32[8,128], index: 0, kind: input, shape index: {}]
  %s1 = inlined_call_operand.hbm [shape: f32[8,128], index: 1, kind: input, shape index: {}]
  %s2 = inlined_call_operand.hbm [shape: f32[8,128], index: 2, kind: input, shape index: {}]
  %s3 = inlined_call_operand.hbm [shape: f32[1,1], index: 3, kind: output, shape index: {}]
  %s4 = sld [smem:[#allocation0]]
  $region42: #{tpu_custom_call.1} parent=0
    _
  %s6 = ssub.s32 1, %s4
  %s7 = scalar_select 0, %s6, %s4
  $region1: #{tpu_custom_call.1} parent=0
    #allocation3 [shape = 'u8[4096]{0}', space=vmem, size = 0x1000, scoped, tag = 'input window, operand 0, single buffered']
    #allocation4 [shape = 's32[1]{0}', space=sflag, size = 0x4, scoped, tag = 'scoped memory for tpu_custom_call.1']
    #allocation5 [shape = 's32[1]{0}', space=sflag, size = 0x4, scoped, tag = 'scoped memory for tpu_custom_call.1']
    #allocation6 [shape = 'u8[4096]{0}', space=vmem, size = 0x1000, scoped, tag = 'input window, operand 1, single buffered']
    #allocation7 [shape = 's32[1]{0}', space=sflag, size = 0x4, scoped, tag = 'scoped memory for tpu_custom_call.1']
    #allocation8 [shape = 'u8[4096]{0}', space=vmem, size = 0x1000, scoped, tag = 'input window, operand 2, single buffered']
    #allocation9 [shape = 'u8[512]{0}', space=vmem, size = 0x400, scoped, tag = 'output window, operand 0, single buffered']
    %8 = vsyncpa [#allocation4], 0
    %9 = vsyncpa [#allocation7], 0
    %10 = vsyncpa [#allocation5], 0
    // Predicated region
    $region2: #{tpu_custom_call.1} parent=1 // pred_check
      _
    $region3: #{tpu_custom_call.1} parent=1 // pred_check_branch
      %12 = sbr.rel (0) target = $region5
    $region4: #{tpu_custom_call.1} parent=1 // pred_region
      %14 = vsyncadd [#allocation4], 0
      %s16 = sshll.u32 %s0, 4
      %s17 = int_to_ptr.hbm [resolvable:$true] %s16
      %s18 = sshll.u32 [#allocation3], 4
      %s19 = int_to_ptr.vmem [resolvable:$true] %s18
      %21 = dma.hbm_to_vmem [thread:$0]  %s17, 128, %s19, [#allocation4]
    $region5: #{tpu_custom_call.1} parent=1 // pred_fallthru
      _
    // Predicated region
    $region6: #{tpu_custom_call.1} parent=1 // pred_check
      _
    $region7: #{tpu_custom_call.1} parent=1 // pred_check_branch
      %23 = sbr.rel (0) target = $region9
    $region8: #{tpu_custom_call.1} parent=1 // pred_region
      %25 = vsyncadd [#allocation7], 0
      %s27 = sshll.u32 %s1, 4
      %s28 = int_to_ptr.hbm [resolvable:$true] %s27
      %s29 = sshll.u32 [#allocation6], 4
      %s30 = int_to_ptr.vmem [resolvable:$true] %s29
      %32 = dma.hbm_to_vmem [thread:$0]  %s28, 128, %s30, [#allocation7]
    $region9: #{tpu_custom_call.1} parent=1 // pred_fallthru
      _
    // Predicated region
    $region10: #{tpu_custom_call.1} parent=1 // pred_check
      _
    $region11: #{tpu_custom_call.1} parent=1 // pred_check_branch
      %34 = sbr.rel (0) target = $region13
    $region12: #{tpu_custom_call.1} parent=1 // pred_region
      %36 = vsyncadd [#allocation7], 0
      %s38 = sshll.u32 %s2, 4
      %s39 = int_to_ptr.hbm [resolvable:$true] %s38
      %s40 = sshll.u32 [#allocation8], 4
      %s41 = int_to_ptr.vmem [resolvable:$true] %s40
      %43 = dma.hbm_to_vmem [thread:$0]  %s39, 128, %s41, [#allocation7]
    $region13: #{tpu_custom_call.1} parent=1 // pred_fallthru
      _
    // Predicated region
    $region14: #{tpu_custom_call.1} parent=1 // pred_check
      _
    $region15: #{tpu_custom_call.1} parent=1 // pred_check_branch
      %45 = sbr.rel (0) target = $region17
    $region16: #{tpu_custom_call.1} parent=1 // pred_region
      %47 = dma.done [#allocation4], 128
    $region17: #{tpu_custom_call.1} parent=1 // pred_fallthru
      _
    // Predicated region
    $region18: #{tpu_custom_call.1} parent=1 // pred_check
      _
    $region19: #{tpu_custom_call.1} parent=1 // pred_check_branch
      %49 = sbr.rel (0) target = $region21
    $region20: #{tpu_custom_call.1} parent=1 // pred_region
      %51 = dma.done [#allocation7], 128
    $region21: #{tpu_custom_call.1} parent=1 // pred_fallthru
      _
    // Predicated region
    $region22: #{tpu_custom_call.1} parent=1 // pred_check
      _
    $region23: #{tpu_custom_call.1} parent=1 // pred_check_branch
      %53 = sbr.rel (0) target = $region25
    $region24: #{tpu_custom_call.1} parent=1 // pred_region
      %55 = dma.done [#allocation7], 128
    $region25: #{tpu_custom_call.1} parent=1 // pred_fallthru
      _
    %p56 = scmp.eq.s32.totalorder 0, 0
    // Predicated region
    $region26: #{tpu_custom_call.1} parent=1 // pred_check
      %p57 = pneg %p56
    $region27: #{tpu_custom_call.1} parent=1 // pred_check_branch
      %59 = sbr.rel (%p57) target = $region29
    $region28: #{tpu_custom_call.1} parent=1 // pred_region
      %vm60 = vcmask 0
      %61 = vst.msk [vmem:[#allocation2] sm:$0x1] %vm60, 0.0
    $region29: #{tpu_custom_call.1} parent=1 // pred_fallthru
      _
    %v62 = vld [vmem:[#allocation3] sm:$0xff]
    %v63 = vmul.f32 %v62, %v62
    %64 = vadd.xlane.f32.xlu0 %v63
    %v65 = vpop.xlane.xlu0 %64
    %v66 = vld [vmem:[#allocation6] sm:$0xff]
    %v67 = vmul.f32 %v62, %v66
    %68 = vadd.xlane.f32.xlu0 %v67
    %v69 = vpop.xlane.xlu0 %68
    %v70 = vmul.f32 %v66, %v66
    %71 = vadd.xlane.f32.xlu0 %v70
    %v72 = vpop.xlane.xlu0 %71
    %v73 = vld [vmem:[#allocation8] sm:$0xff]
    %v74 = vmul.f32 %v62, %v73
    %75 = vadd.xlane.f32.xlu0 %v74
    %v76 = vpop.xlane.xlu0 %75
    %v77 = vmul.f32 %v73, %v73
    %78 = vadd.xlane.f32.xlu0 %v77
    %v79 = vpop.xlane.xlu0 %78
    %v80 = vmul.f32 %v65, %v72
    %v81 = vmax.f32 %v80, 1e-12
    %v82 = vrsqrt.pop %v81
    %v83 = vmul.f32 %v82, %v81
    %v84 = vmul.f32 %v83, %v82
    %v85 = vmul.f32 0.5, %v84
    %v86 = vsub.f32 1.5, %v85
    %v87 = vmul.f32 %v82, %v86
    %vm88 = vweird.f32 %v81
    %vm89 = vweird.f32 %v82
    %vm90 = vmor %vm88, %vm89
    %v91 = vsel %vm90, %v82, %v87
    %v92 = vmul.f32 %v69, %v91
    %v93 = vmul.f32 %v65, %v79
    %v94 = vmax.f32 %v93, 1e-12
    %v95 = vrsqrt.pop %v94
    %v96 = vmul.f32 %v95, %v94
    %v97 = vmul.f32 %v96, %v95
    %v98 = vmul.f32 0.5, %v97
    %v99 = vsub.f32 1.5, %v98
    %v100 = vmul.f32 %v95, %v99
    %vm101 = vweird.f32 %v94
    %vm102 = vweird.f32 %v95
    %vm103 = vmor %vm101, %vm102
    %v104 = vsel %vm103, %v95, %v100
    %v105 = vmul.f32 %v76, %v104
    %v106 = vsub.f32 1.0, %v92
    %v107 = vmax.f32 %v106, 0.0
    %v108 = vmul.f32 %v105, %v105
    %v109 = vmul.f32 %v107, %v107
    %v110 = vadd.f32 %v108, %v109
    %s111 = smul.u32 0, 8
    %v112 = vlaneseq
    %v113 = vshrl.u32 %v112, 7
    %v114 = vstv %s111
    %v115 = vadd.s32 %v114, %v113
    %vm116 = vcmp.lt.s32.totalorder %v115, 8
    %v117 = vsel %vm116, %v110, 0.0
    %v118 = vld [vmem:[#allocation2] sm:$0x1]
    %vm119 = vcmask 7168
    %v120 = vsel %vm119, %v117, 0.0
    %121 = vadd.xlane.f32.xlu0 %v120
    %v122 = vpop.xlane.xlu0 %121
    %v123 = vrot.slane %v122, 4
    %v124 = vadd.f32 %v122, %v123
    %v125 = vrot.slane %v124, 2
    %v126 = vadd.f32 %v124, %v125
    %v127 = vrot.slane %v126, 1
    %v128 = vadd.f32 %v126, %v127
    %s129 = vtos %v128
    %v130 = vstv %s129
    %v131 = vadd.f32 %v118, %v130
    %vm132 = vcmask 0
    %133 = vst.msk [vmem:[#allocation2] sm:$0x1] %vm132, %v131
    // Predicated region
    $region30: #{tpu_custom_call.1} parent=1 // pred_check
      %p134 = pneg %p56
    $region31: #{tpu_custom_call.1} parent=1 // pred_check_branch
      %136 = sbr.rel (%p134) target = $region33
    $region32: #{tpu_custom_call.1} parent=1 // pred_region
      %v137 = vld [vmem:[#allocation2] sm:$0x1]
      %v138 = vmul.f32 %v137, 0.125
      %139 = vst.msk [vmem:[#allocation9] sm:$0x1] %vm132, %v138
    $region33: #{tpu_custom_call.1} parent=1 // pred_fallthru
      _
    // Predicated region
    $region34: #{tpu_custom_call.1} parent=1 // pred_check
      _
    $region35: #{tpu_custom_call.1} parent=1 // pred_check_branch
      %141 = sbr.rel (0) target = $region37
    $region36: #{tpu_custom_call.1} parent=1 // pred_region
      %143 = vsyncadd [#allocation5], 0
      %s145 = sshll.u32 [#allocation9], 4
      %s146 = int_to_ptr.vmem [resolvable:$true] %s145
      %s147 = sshll.u32 %s3, 4
      %s148 = int_to_ptr.hbm [resolvable:$true] %s147
      %150 = dma.vmem_to_hbm [thread:$0]  %s146, 16, %s148, [#allocation5]
    $region37: #{tpu_custom_call.1} parent=1 // pred_fallthru
      _
    // Predicated region
    $region38: #{tpu_custom_call.1} parent=1 // pred_check
      _
    $region39: #{tpu_custom_call.1} parent=1 // pred_check_branch
      %152 = sbr.rel (0) target = $region41
    $region40: #{tpu_custom_call.1} parent=1 // pred_region
      %154 = dma.done [#allocation5], 16
    $region41: #{tpu_custom_call.1} parent=1 // pred_fallthru
      _
    %155 = vsyncpa [#allocation4], 1
    %156 = vsyncpa [#allocation7], 1
    %157 = vsyncpa [#allocation5], 1

</llo_original>
